<compile_context>
chip_gen: v5e
topology: v5e:2x2
jax: 0.10.0
libtpu: 0.0.40
codegen_flags: <defaults>
</compile_context>

<pallas_src>
import functools

import jax
import jax.numpy as jnp
from jax.experimental import pallas as pl
from jax.experimental.pallas import tpu as pltpu


def _expert_mlp_kernel(x_ref, w1_ref, b1_ref, w2_ref, b2_ref, o_ref, *,
                       compute_dtype):
    # x_ref : (TN, D)  token tile for the current (expert, batch) pair
    # w1_ref: (D, H),  b1_ref: (1, H)
    # w2_ref: (H, D),  b2_ref: (1, D)
    # o_ref : (TN, D)
    x = x_ref[...]
    w1 = w1_ref[...]
    w2 = w2_ref[...]
    if compute_dtype is not None:
        x = x.astype(compute_dtype)
        w1 = w1.astype(compute_dtype)
        w2 = w2.astype(compute_dtype)

    # First matmul (MXU) with f32 accumulation; bias + GELU in f32.
    h = jnp.dot(x, w1, preferred_element_type=jnp.float32)       # (TN, H) f32
    h = h + b1_ref[...].astype(jnp.float32)                      # bcast (1, H)
    h = jax.nn.gelu(h)

    # Second matmul (MXU) with f32 accumulation.
    o = jnp.dot(h.astype(w2.dtype), w2,
                preferred_element_type=jnp.float32)              # (TN, D) f32
    o = o + b2_ref[...].astype(jnp.float32)                      # bcast (1, D)
    o_ref[...] = o.astype(o_ref.dtype)


def _pick_token_tile(n, target=512):
    """Largest token tile <= target that divides n and is sublane-aligned."""
    if n <= target:
        return n
    for t in range(target, 7, -1):
        if n % t == 0 and t % 8 == 0:
            return t
    # No aligned divisor found -> fall back to the full token axis.
    return n


def experts_forward(x, w1, b1, w2, b2, *, token_tile=512, compute_dtype=None):
    """Pallas equivalent of Experts.forward (non-distributed path).

    x  : (B, E, N, D)
    w1 : (E, D, H), b1 : (E, 1, H)
    w2 : (E, H, D), b2 : (E, 1, D)
    returns (B, E, N, D)
    """
    B, E, N, D = x.shape
    H = w1.shape[-1]
    assert w1.shape == (E, D, H), w1.shape
    assert b1.shape == (E, 1, H), b1.shape
    assert w2.shape == (E, H, D), w2.shape
    assert b2.shape == (E, 1, D), b2.shape

    TN = _pick_token_tile(N, token_tile)
    num_t = N // TN
    grid = (E, B, num_t)

    # --- VMEM budget (double-buffered x/out + resident weights + f32 temp) ---
    act_bytes = jnp.dtype(x.dtype).itemsize
    w_bytes = jnp.dtype(w1.dtype).itemsize
    vmem_est = (2 * TN * D * act_bytes            # x (double-buffered)
                + 2 * TN * D * act_bytes          # out (double-buffered)
                + 2 * (D * H + H * D + H + D) * w_bytes   # weights + biases
                + TN * H * 4)                     # f32 GELU intermediate
    vmem_limit = int(min(max(int(1.5 * vmem_est), 32 * 1024 * 1024),
                         48 * 1024 * 1024))       # leaves headroom on v7x

    cost = pl.CostEstimate(
        flops=4 * B * E * N * D * H,              # two matmuls
        transcendentals=B * E * N * H,            # GELU
        bytes_accessed=(2 * B * E * N * D * act_bytes
                        + E * (D * H + H * D + H + D) * w_bytes),
    )

    kernel = functools.partial(_expert_mlp_kernel, compute_dtype=compute_dtype)

    out = pl.pallas_call(
        kernel,
        out_shape=jax.ShapeDtypeStruct((B, E, N, D), x.dtype),
        grid=grid,
        in_specs=[
            # x tile: (b, e, token-tile) on the ORIGINAL layout -> no host transpose.
            pl.BlockSpec((None, None, TN, D), lambda e, b, t: (b, e, t, 0)),
            # Per-expert weights/biases: index depends only on e, so they stay
            # resident in VMEM across all (b, t) iterations of an expert.
            pl.BlockSpec((None, D, H), lambda e, b, t: (e, 0, 0)),
            pl.BlockSpec((None, 1, H), lambda e, b, t: (e, 0, 0)),
            pl.BlockSpec((None, H, D), lambda e, b, t: (e, 0, 0)),
            pl.BlockSpec((None, 1, D), lambda e, b, t: (e, 0, 0)),
        ],
        out_specs=pl.BlockSpec((None, None, TN, D), lambda e, b, t: (b, e, t, 0)),
        compiler_params=pltpu.CompilerParams(
            dimension_semantics=("parallel", "parallel", "parallel"),
            vmem_limit_bytes=vmem_limit,
        ),
        cost_estimate=cost,
    )(x, w1, b1, w2, b2)

    return out


def _reference(x, w1, b1, w2, b2):
    # Pure-JAX reference of the same semantics.
    x_e = jnp.transpose(x, (1, 0, 2, 3))                          # (E, B, N, D)
    h = jnp.einsum('ebnd,edh->ebnh', x_e, w1) + b1[:, None, :, :]
    h = jax.nn.gelu(h)
    o = jnp.einsum('ebnh,ehd->ebnd', h, w2) + b2[:, None, :, :]
    return jnp.transpose(o, (1, 0, 2, 3))                          # (B, E, N, D)


if __name__ == "__main__":
    key = jax.random.PRNGKey(0)
    B, E, N, D, H = 2, 4, 16, 32, 64

    k_x, k_w1, k_b1, k_w2, k_b2 = jax.random.split(key, 5)
    x = jax.random.normal(k_x, (B, E, N, D), dtype=jnp.float32)
    w1 = jax.random.normal(k_w1, (E, D, H), dtype=jnp.float32) * 0.05
    b1 = jax.random.normal(k_b1, (E, 1, H), dtype=jnp.float32) * 0.01
    w2 = jax.random.normal(k_w2, (E, H, D), dtype=jnp.float32) * 0.05
    b2 = jax.random.normal(k_b2, (E, 1, D), dtype=jnp.float32) * 0.01

    out = experts_forward(x, w1, b1, w2, b2)
    out = jax.block_until_ready(out)

    assert out.shape == x.shape, (out.shape, x.shape)

    ref = _reference(x, w1, b1, w2, b2)
    assert jnp.allclose(out, ref, atol=1e-4, rtol=1e-4), \
        float(jnp.max(jnp.abs(out - ref)))

    print("KERNEL_OK")
</pallas_src>

<mosaic_0001>
module attributes {stable_mosaic.version = 11 : i64} {
  func.func @_expert_mlp_kernel(%arg0: i32, %arg1: i32, %arg2: i32, %arg3: memref<1x1x16x32xf32, #tpu.memory_space<vmem>>, %arg4: memref<1x32x64xf32, #tpu.memory_space<vmem>>, %arg5: memref<1x1x64xf32, #tpu.memory_space<vmem>>, %arg6: memref<1x64x32xf32, #tpu.memory_space<vmem>>, %arg7: memref<1x1x32xf32, #tpu.memory_space<vmem>>, %arg8: memref<1x1x16x32xf32, #tpu.memory_space<vmem>>) attributes {dimension_semantics = [#tpu.dimension_semantics<parallel>, #tpu.dimension_semantics<parallel>, #tpu.dimension_semantics<parallel>], iteration_bounds = array<i64: 4, 2, 1>, scalar_prefetch = 0 : i64, scratch_operands = 0 : i64, tpu.core_type = #tpu.core_type<tc>, window_params = [{transform_indices = @transform_0, window_bounds = array<i64: 1, 1, 16, 32>}, {transform_indices = @transform_1, window_bounds = array<i64: 1, 32, 64>}, {transform_indices = @transform_2, window_bounds = array<i64: 1, 1, 64>}, {transform_indices = @transform_3, window_bounds = array<i64: 1, 64, 32>}, {transform_indices = @transform_4, window_bounds = array<i64: 1, 1, 32>}, {transform_indices = @transform_5, window_bounds = array<i64: 1, 1, 16, 32>}]} {
    %c0 = arith.constant 0 : index
    %c0_0 = arith.constant 0 : index
    %c0_1 = arith.constant 0 : index
    %c0_2 = arith.constant 0 : index
    %0 = vector.load %arg3[%c0, %c0_0, %c0_1, %c0_2] : memref<1x1x16x32xf32, #tpu.memory_space<vmem>>, vector<1x1x16x32xf32>
    %1 = vector.shape_cast %0 : vector<1x1x16x32xf32> to vector<16x32xf32>
    %c0_3 = arith.constant 0 : index
    %c0_4 = arith.constant 0 : index
    %c0_5 = arith.constant 0 : index
    %2 = vector.load %arg4[%c0_3, %c0_4, %c0_5] : memref<1x32x64xf32, #tpu.memory_space<vmem>>, vector<1x32x64xf32>
    %3 = vector.shape_cast %2 : vector<1x32x64xf32> to vector<32x64xf32>
    %c0_6 = arith.constant 0 : index
    %c0_7 = arith.constant 0 : index
    %c0_8 = arith.constant 0 : index
    %4 = vector.load %arg6[%c0_6, %c0_7, %c0_8] : memref<1x64x32xf32, #tpu.memory_space<vmem>>, vector<1x64x32xf32>
    %5 = vector.shape_cast %4 : vector<1x64x32xf32> to vector<64x32xf32>
    %cst = arith.constant dense<0.000000e+00> : vector<16x64xf32>
    %6 = tpu.matmul %1, %3, %cst {dimension_numbers = #tpu.dot_dimension_numbers<[1], [0], [0], [1], [0, 0, 1, 1], [], []>} : vector<16x32xf32>, vector<32x64xf32>, vector<16x64xf32> -> vector<16x64xf32>
    %c0_9 = arith.constant 0 : index
    %c0_10 = arith.constant 0 : index
    %c0_11 = arith.constant 0 : index
    %7 = vector.load %arg5[%c0_9, %c0_10, %c0_11] : memref<1x1x64xf32, #tpu.memory_space<vmem>>, vector<1x1x64xf32>
    %8 = vector.shape_cast %7 : vector<1x1x64xf32> to vector<1x64xf32>
    %9 = vector.broadcast %8 : vector<1x64xf32> to vector<16x64xf32>
    %10 = arith.addf %6, %9 : vector<16x64xf32>
    %11 = arith.mulf %10, %10 : vector<16x64xf32>
    %12 = arith.mulf %10, %11 : vector<16x64xf32>
    %cst_12 = arith.constant 4.471500e-02 : f32
    %13 = vector.broadcast %cst_12 : f32 to vector<16x64xf32>
    %14 = arith.mulf %13, %12 : vector<16x64xf32>
    %15 = arith.addf %10, %14 : vector<16x64xf32>
    %cst_13 = arith.constant 0.797884583 : f32
    %16 = vector.broadcast %cst_13 : f32 to vector<16x64xf32>
    %17 = arith.mulf %16, %15 : vector<16x64xf32>
    %18 = math.tanh %17 : vector<16x64xf32>
    %cst_14 = arith.constant 1.000000e+00 : f32
    %19 = vector.broadcast %cst_14 : f32 to vector<16x64xf32>
    %20 = arith.addf %19, %18 : vector<16x64xf32>
    %cst_15 = arith.constant 5.000000e-01 : f32
    %21 = vector.broadcast %cst_15 : f32 to vector<16x64xf32>
    %22 = arith.mulf %21, %20 : vector<16x64xf32>
    %23 = arith.mulf %10, %22 : vector<16x64xf32>
    %cst_16 = arith.constant dense<0.000000e+00> : vector<16x32xf32>
    %24 = tpu.matmul %23, %5, %cst_16 {dimension_numbers = #tpu.dot_dimension_numbers<[1], [0], [0], [1], [0, 0, 1, 1], [], []>} : vector<16x64xf32>, vector<64x32xf32>, vector<16x32xf32> -> vector<16x32xf32>
    %c0_17 = arith.constant 0 : index
    %c0_18 = arith.constant 0 : index
    %c0_19 = arith.constant 0 : index
    %25 = vector.load %arg7[%c0_17, %c0_18, %c0_19] : memref<1x1x32xf32, #tpu.memory_space<vmem>>, vector<1x1x32xf32>
    %26 = vector.shape_cast %25 : vector<1x1x32xf32> to vector<1x32xf32>
    %27 = vector.broadcast %26 : vector<1x32xf32> to vector<16x32xf32>
    %28 = arith.addf %24, %27 : vector<16x32xf32>
    %c0_20 = arith.constant 0 : index
    %c0_21 = arith.constant 0 : index
    %c0_22 = arith.constant 0 : index
    %c0_23 = arith.constant 0 : index
    %29 = vector.load %arg8[%c0_20, %c0_21, %c0_22, %c0_23] : memref<1x1x16x32xf32, #tpu.memory_space<vmem>>, vector<1x1x16x32xf32>
    %30 = vector.shape_cast %29 : vector<1x1x16x32xf32> to vector<16x32xf32>
    %31 = vector.shape_cast %28 : vector<16x32xf32> to vector<1x1x16x32xf32>
    tpu.vector_store %arg8[%c0_20, %c0_21, %c0_22, %c0_23], %31 {strides = array<i32>} : memref<1x1x16x32xf32, #tpu.memory_space<vmem>>, vector<1x1x16x32xf32>,
    return
  }
  func.func @transform_0(%arg0: i32, %arg1: i32, %arg2: i32) -> (i32, i32, i32, i32) {
    %c0_i32 = arith.constant 0 : i32
    %c0_i32_0 = arith.constant 0 : i32
    return %arg1, %arg0, %arg2, %c0_i32 : i32, i32, i32, i32
  }
  func.func @transform_1(%arg0: i32, %arg1: i32, %arg2: i32) -> (i32, i32, i32) {
    %c0_i32 = arith.constant 0 : i32
    %c0_i32_0 = arith.constant 0 : i32
    %c0_i32_1 = arith.constant 0 : i32
    return %arg0, %c0_i32, %c0_i32_0 : i32, i32, i32
  }
  func.func @transform_2(%arg0: i32, %arg1: i32, %arg2: i32) -> (i32, i32, i32) {
    %c0_i32 = arith.constant 0 : i32
    %c0_i32_0 = arith.constant 0 : i32
    %c0_i32_1 = arith.constant 0 : i32
    return %arg0, %c0_i32, %c0_i32_0 : i32, i32, i32
  }
  func.func @transform_3(%arg0: i32, %arg1: i32, %arg2: i32) -> (i32, i32, i32) {
    %c0_i32 = arith.constant 0 : i32
    %c0_i32_0 = arith.constant 0 : i32
    %c0_i32_1 = arith.constant 0 : i32
    return %arg0, %c0_i32, %c0_i32_0 : i32, i32, i32
  }
  func.func @transform_4(%arg0: i32, %arg1: i32, %arg2: i32) -> (i32, i32, i32) {
    %c0_i32 = arith.constant 0 : i32
    %c0_i32_0 = arith.constant 0 : i32
    %c0_i32_1 = arith.constant 0 : i32
    return %arg0, %c0_i32, %c0_i32_0 : i32, i32, i32
  }
  func.func @transform_5(%arg0: i32, %arg1: i32, %arg2: i32) -> (i32, i32, i32, i32) {
    %c0_i32 = arith.constant 0 : i32
    %c0_i32_0 = arith.constant 0 : i32
    return %arg1, %arg0, %arg2, %c0_i32 : i32, i32, i32, i32
  }
}

</mosaic_0001>

<llo_original>
// kernel: tpu_custom_call.1
$region0: #{tpu_custom_call.1}
  #allocation0 [shape = 'u32[]', space=smem, size = 0x4, offset = 0x4, fixed_abs, tag = 'smem constant byte address 0x4 - core index']
  #allocation1 [shape = 'u32[72,128]{1,0:T(1,128)}', space=vmem, size = 0x9000, scoped, tag = 'internal scratch']
  %s0 = inlined_call_operand.vmem [shape: f32[2,4,16,32], index: 0, kind: input, shape index: {}]
  %s1 = inlined_call_operand.vmem [shape: f32[4,32,64], index: 1, kind: input, shape index: {}]
  %s2 = inlined_call_operand.vmem [shape: f32[4,1,64], index: 2, kind: input, shape index: {}]
  %s3 = inlined_call_operand.vmem [shape: f32[4,64,32], index: 3, kind: input, shape index: {}]
  %s4 = inlined_call_operand.vmem [shape: f32[4,1,32], index: 4, kind: input, shape index: {}]
  %s5 = inlined_call_operand.hbm [shape: f32[2,4,16,32], index: 5, kind: output, shape index: {}]
  %s6 = sld [smem:[#allocation0]]
  $region53: #{tpu_custom_call.1} parent=0
    _
  %s8 = ssub.s32 1, %s6
  %s9 = scalar_select 0, %s8, %s6
  $region1: #{tpu_custom_call.1} parent=0
    #allocation2 [shape = 'u8[16384]{0}', space=vmem, size = 0x4000, scoped, tag = 'output window, operand 0']
    #allocation3 [shape = 's32[2]{0}', space=sflag, size = 0x8, scoped, tag = 'scoped memory for tpu_custom_call.1']
    %10 = vsyncpa [#allocation3], 0
    %s11 = scalar_lea.sflag [#allocation3], 1
    %12 = vsyncpa %s11, 0
    loop: start=0, step=1, limit=10
    $region2: #{tpu_custom_call.1} parent=1 // loop_pre_header
      _
    $region3: #{tpu_custom_call.1} parent=1 // loop_header
      %s14 = sphi 0, %s18
      %p15 = scmp.ge.s32.totalorder %s14, 10
      %s21 = sphi 0, %s40
      %s22 = sphi 0, %s36
      %s23 = sphi 0, %s32
      %s24 = sphi 0, %s21
      %s25 = sphi 0, %s22
      %s26 = sphi 0, %s23
      %s27 = sphi 0, %s24
      %s28 = sphi 0, %s25
      %s29 = sphi 0, %s26
      %s47 = sphi 0, %s49
      %s50 = sphi 0, %s47
      %s51 = sphi 0, %s50
      %s67 = sphi 0, %s51
      %s73 = sphi 0, %s75
      %s76 = sphi 0, %s73
      %s77 = sphi 0, %s76
      %s93 = sphi 0, %s77
      %s99 = sphi 0, %s101
      %s102 = sphi 0, %s99
      %s103 = sphi 0, %s102
      %s119 = sphi 0, %s103
      %s125 = sphi 0, %s127
      %s128 = sphi 0, %s125
      %s129 = sphi 0, %s128
      %s145 = sphi 0, %s129
      %s151 = sphi 0, %s153
      %s154 = sphi 0, %s151
      %s155 = sphi 0, %s154
      %s171 = sphi 0, %s155
      %s181 = sphi 0, %s183
      %s184 = sphi 0, %s181
      %s185 = sphi 0, %s184
      %s201 = sphi 0, %s185
    $region4: #{tpu_custom_call.1} parent=1 // loop_header_branch
      %17 = sbr.rel (%p15) target = $region8
    $region5: #{tpu_custom_call.1} parent=1 // loop_body
      %s19 = ssub.s32 %s14, 1
      %s20 = ssub.s32 %s14, 2
      %s30 = sadd.s32 1, %s23
      %p31 = scmp.ge.s32.totalorder %s30, 1
      %s32 = scalar_select %p31, 0, %s30
      %s33 = sadd.s32 1, %s22
      %s34 = scalar_select %p31, %s33, %s22
      %p35 = scmp.ge.s32.totalorder %s34, 2
      %s36 = scalar_select %p35, 0, %s34
      %s37 = sadd.s32 1, %s21
      %s38 = scalar_select %p35, %s37, %s21
      %p39 = scmp.ge.s32.totalorder %s38, 4
      %s40 = scalar_select %p39, 0, %s38
      %s41 = ssub.s32 %s22, %s36
      %s42 = ssub.s32 %s21, %s40
      %s43 = sor.u32 %s41, %s42
      %s44 = ssub.s32 %s23, %s32
      %s45 = sor.u32 %s43, %s44
      %p46 = scmp.eq.s32.totalorder %s45, 0
      %s48 = sadd.s32 %s47, 1
      %s49 = scalar_select %p46, %s47, %s48
      %p52 = pneg %p46
      %p53 = scmp.eq.s32.totalorder %s14, 7
      %p54 = por %p52, %p53
      %p55 = scmp.ne.s32.totalorder %s47, %s50
      %p56 = scmp.eq.s32.totalorder %s14, 0
      %p57 = por %p55, %p56
      %p58 = scmp.ne.s32.totalorder %s47, %s50
      %p59 = scmp.eq.s32.totalorder %s19, 7
      %p60 = por %p58, %p59
      %p61 = scmp.ne.s32.totalorder %s50, %s51
      %p62 = scmp.eq.s32.totalorder %s19, 0
      %p63 = por %p61, %p62
      %p64 = scmp.ne.s32.totalorder %s50, %s51
      %p65 = scmp.eq.s32.totalorder %s20, 7
      %p66 = por %p64, %p65
      %p68 = scmp.ne.s32.totalorder %s51, %s67
      %p69 = scmp.eq.s32.totalorder %s20, 0
      %p70 = por %p68, %p69
      %s71 = ssub.s32 %s21, %s40
      %p72 = scmp.eq.s32.totalorder %s71, 0
      %s74 = sadd.s32 %s73, 1
      %s75 = scalar_select %p72, %s73, %s74
      %p78 = pneg %p72
      %p79 = scmp.eq.s32.totalorder %s14, 7
      %p80 = por %p78, %p79
      %p81 = scmp.ne.s32.totalorder %s73, %s76
      %p82 = scmp.eq.s32.totalorder %s14, 0
      %p83 = por %p81, %p82
      %p84 = scmp.ne.s32.totalorder %s73, %s76
      %p85 = scmp.eq.s32.totalorder %s19, 7
      %p86 = por %p84, %p85
      %p87 = scmp.ne.s32.totalorder %s76, %s77
      %p88 = scmp.eq.s32.totalorder %s19, 0
      %p89 = por %p87, %p88
      %p90 = scmp.ne.s32.totalorder %s76, %s77
      %p91 = scmp.eq.s32.totalorder %s20, 7
      %p92 = por %p90, %p91
      %p94 = scmp.ne.s32.totalorder %s77, %s93
      %p95 = scmp.eq.s32.totalorder %s20, 0
      %p96 = por %p94, %p95
      %s97 = ssub.s32 %s21, %s40
      %p98 = scmp.eq.s32.totalorder %s97, 0
      %s100 = sadd.s32 %s99, 1
      %s101 = scalar_select %p98, %s99, %s100
      %p104 = pneg %p98
      %p105 = scmp.eq.s32.totalorder %s14, 7
      %p106 = por %p104, %p105
      %p107 = scmp.ne.s32.totalorder %s99, %s102
      %p108 = scmp.eq.s32.totalorder %s14, 0
      %p109 = por %p107, %p108
      %p110 = scmp.ne.s32.totalorder %s99, %s102
      %p111 = scmp.eq.s32.totalorder %s19, 7
      %p112 = por %p110, %p111
      %p113 = scmp.ne.s32.totalorder %s102, %s103
      %p114 = scmp.eq.s32.totalorder %s19, 0
      %p115 = por %p113, %p114
      %p116 = scmp.ne.s32.totalorder %s102, %s103
      %p117 = scmp.eq.s32.totalorder %s20, 7
      %p118 = por %p116, %p117
      %p120 = scmp.ne.s32.totalorder %s103, %s119
      %p121 = scmp.eq.s32.totalorder %s20, 0
      %p122 = por %p120, %p121
      %s123 = ssub.s32 %s21, %s40
      %p124 = scmp.eq.s32.totalorder %s123, 0
      %s126 = sadd.s32 %s125, 1
      %s127 = scalar_select %p124, %s125, %s126
      %p130 = pneg %p124
      %p131 = scmp.eq.s32.totalorder %s14, 7
      %p132 = por %p130, %p131
      %p133 = scmp.ne.s32.totalorder %s125, %s128
      %p134 = scmp.eq.s32.totalorder %s14, 0
      %p135 = por %p133, %p134
      %p136 = scmp.ne.s32.totalorder %s125, %s128
      %p137 = scmp.eq.s32.totalorder %s19, 7
      %p138 = por %p136, %p137
      %p139 = scmp.ne.s32.totalorder %s128, %s129
      %p140 = scmp.eq.s32.totalorder %s19, 0
      %p141 = por %p139, %p140
      %p142 = scmp.ne.s32.totalorder %s128, %s129
      %p143 = scmp.eq.s32.totalorder %s20, 7
      %p144 = por %p142, %p143
      %p146 = scmp.ne.s32.totalorder %s129, %s145
      %p147 = scmp.eq.s32.totalorder %s20, 0
      %p148 = por %p146, %p147
      %s149 = ssub.s32 %s21, %s40
      %p150 = scmp.eq.s32.totalorder %s149, 0
      %s152 = sadd.s32 %s151, 1
      %s153 = scalar_select %p150, %s151, %s152
      %p156 = pneg %p150
      %p157 = scmp.eq.s32.totalorder %s14, 7
      %p158 = por %p156, %p157
      %p159 = scmp.ne.s32.totalorder %s151, %s154
      %p160 = scmp.eq.s32.totalorder %s14, 0
      %p161 = por %p159, %p160
      %p162 = scmp.ne.s32.totalorder %s151, %s154
      %p163 = scmp.eq.s32.totalorder %s19, 7
      %p164 = por %p162, %p163
      %p165 = scmp.ne.s32.totalorder %s154, %s155
      %p166 = scmp.eq.s32.totalorder %s19, 0
      %p167 = por %p165, %p166
      %p168 = scmp.ne.s32.totalorder %s154, %s155
      %p169 = scmp.eq.s32.totalorder %s20, 7
      %p170 = por %p168, %p169
      %p172 = scmp.ne.s32.totalorder %s155, %s171
      %p173 = scmp.eq.s32.totalorder %s20, 0
      %p174 = por %p172, %p173
      %s175 = ssub.s32 %s22, %s36
      %s176 = ssub.s32 %s21, %s40
      %s177 = sor.u32 %s175, %s176
      %s178 = ssub.s32 %s23, %s32
      %s179 = sor.u32 %s177, %s178
      %p180 = scmp.eq.s32.totalorder %s179, 0
      %s182 = sadd.s32 %s181, 1
      %s183 = scalar_select %p180, %s181, %s182
      %p186 = pneg %p180
      %p187 = scmp.eq.s32.totalorder %s14, 7
      %p188 = por %p186, %p187
      %p189 = scmp.ne.s32.totalorder %s181, %s184
      %p190 = scmp.eq.s32.totalorder %s14, 0
      %p191 = por %p189, %p190
      %p192 = scmp.ne.s32.totalorder %s181, %s184
      %p193 = scmp.eq.s32.totalorder %s19, 7
      %p194 = por %p192, %p193
      %p195 = scmp.ne.s32.totalorder %s184, %s185
      %p196 = scmp.eq.s32.totalorder %s19, 0
      %p197 = por %p195, %p196
      %p198 = scmp.ne.s32.totalorder %s184, %s185
      %p199 = scmp.eq.s32.totalorder %s20, 7
      %p200 = por %p198, %p199
      %p202 = scmp.ne.s32.totalorder %s185, %s201
      %p203 = scmp.eq.s32.totalorder %s20, 0
      %p204 = por %p202, %p203
      %p205 = scmp.le.s32.totalorder 1, %s14
      %p206 = scmp.lt.s32.totalorder %s14, 9
      %p207 = pnand %p205, %p206
      %p208 = pneg %p207
      // Predicated region
      $region9: #{tpu_custom_call.1} parent=5 // pred_check
        _
      $region10: #{tpu_custom_call.1} parent=5 // pred_check_branch
        %210 = sbr.rel (%p207) target = $region12
      $region11: #{tpu_custom_call.1} parent=5 // pred_region
        %s211 = ssub.s32 %s14, 1
      $region12: #{tpu_custom_call.1} parent=5 // pred_fallthru
        _
      %p212 = scmp.lt.s32.totalorder %s14, 8
      // Predicated region
      $region13: #{tpu_custom_call.1} parent=5 // pred_check
        %p213 = pneg %p212
      $region14: #{tpu_custom_call.1} parent=5 // pred_check_branch
        %215 = sbr.rel (%p213) target = $region16
      $region15: #{tpu_custom_call.1} parent=5 // pred_region
        // Predicated region
        $region17: #{tpu_custom_call.1} parent=15 // pred_check
          %p216 = pneg %p57
        $region18: #{tpu_custom_call.1} parent=15 // pred_check_branch
          %218 = sbr.rel (%p216) target = $region20
        $region19: #{tpu_custom_call.1} parent=15 // pred_region
          %s219 = smul.u32 2, %s23
          %p220 = scmp.lt.s32.totalorder %s22, 1
          %s221 = scalar_select %p220, %s22, 1
          %p222 = scmp.lt.s32.totalorder %s21, 3
          %s223 = scalar_select %p222, %s21, 3
          %p224 = scmp.lt.s32.totalorder %s219, 1
          %s225 = scalar_select %p224, %s219, 1
          %s226 = smul.addr %s223, 2
          %s227 = sadd.s32 %s225, %s226
          %s228 = smul.addr %s221, 8
          %s229 = sadd.s32 %s227, %s228
          %s230 = smul.addr %s229, 8
          %s231 = scalar_lea.vmem %s0, %s230
          %s232 = smul.u32 2, %s23
        $region20: #{tpu_custom_call.1} parent=15 // pred_fallthru
          _
        // Predicated region
        $region21: #{tpu_custom_call.1} parent=15 // pred_check
          %p233 = pneg %p83
        $region22: #{tpu_custom_call.1} parent=15 // pred_check_branch
          %235 = sbr.rel (%p233) target = $region24
        $region23: #{tpu_custom_call.1} parent=15 // pred_region
          %p236 = scmp.lt.s32.totalorder %s21, 3
          %s237 = scalar_select %p236, %s21, 3
          %s238 = smul.addr %s237, 4
          %s239 = smul.addr %s238, 8
          %s240 = scalar_lea.vmem %s1, %s239
        $region24: #{tpu_custom_call.1} parent=15 // pred_fallthru
          _
        // Predicated region
        $region25: #{tpu_custom_call.1} parent=15 // pred_check
          %p241 = pneg %p109
        $region26: #{tpu_custom_call.1} parent=15 // pred_check_branch
          %243 = sbr.rel (%p241) target = $region28
        $region27: #{tpu_custom_call.1} parent=15 // pred_region
          %p244 = scmp.lt.s32.totalorder %s21, 3
          %s245 = scalar_select %p244, %s21, 3
          %s246 = scalar_lea.vmem %s2, %s245
        $region28: #{tpu_custom_call.1} parent=15 // pred_fallthru
          _
        // Predicated region
        $region29: #{tpu_custom_call.1} parent=15 // pred_check
          %p247 = pneg %p135
        $region30: #{tpu_custom_call.1} parent=15 // pred_check_branch
          %249 = sbr.rel (%p247) target = $region32
        $region31: #{tpu_custom_call.1} parent=15 // pred_region
          %p250 = scmp.lt.s32.totalorder %s21, 3
          %s251 = scalar_select %p250, %s21, 3
          %s252 = smul.addr %s251, 8
          %s253 = smul.addr %s252, 8
          %s254 = scalar_lea.vmem %s3, %s253
        $region32: #{tpu_custom_call.1} parent=15 // pred_fallthru
          _
        // Predicated region
        $region33: #{tpu_custom_call.1} parent=15 // pred_check
          %p255 = pneg %p161
        $region34: #{tpu_custom_call.1} parent=15 // pred_check_branch
          %257 = sbr.rel (%p255) target = $region36
        $region35: #{tpu_custom_call.1} parent=15 // pred_region
          %p258 = scmp.lt.s32.totalorder %s21, 3
          %s259 = scalar_select %p258, %s21, 3
          %s260 = scalar_lea.vmem %s4, %s259
        $region36: #{tpu_custom_call.1} parent=15 // pred_fallthru
          _
      $region16: #{tpu_custom_call.1} parent=5 // pred_fallthru
        _
      %p261 = scmp.le.s32.totalorder 1, %s14
      %p262 = scmp.lt.s32.totalorder %s14, 9
      %p263 = pnand %p261, %p262
      %p264 = pneg %p263
      // Predicated region
      $region37: #{tpu_custom_call.1} parent=5 // pred_check
        _
      $region38: #{tpu_custom_call.1} parent=5 // pred_check_branch
        %266 = sbr.rel (%p263) target = $region40
      $region39: #{tpu_custom_call.1} parent=5 // pred_region
        %s267 = ssub.s32 %s14, 1
        %s268 = smul.u32 2, %s26
        %p269 = scmp.lt.s32.totalorder %s25, 1
        %s270 = scalar_select %p269, %s25, 1
        %p271 = scmp.lt.s32.totalorder %s24, 3
        %s272 = scalar_select %p271, %s24, 3
        %p273 = scmp.lt.s32.totalorder %s268, 1
        %s274 = scalar_select %p273, %s268, 1
        %s275 = smul.addr %s272, 2
        %s276 = sadd.s32 %s274, %s275
        %s277 = smul.addr %s270, 8
        %s278 = sadd.s32 %s276, %s277
        %s279 = smul.addr %s278, 8
        %s280 = scalar_lea.vmem %s0, %s279
        %p281 = pneg %p63
        %p282 = pneg %p60
        %p283 = scmp.lt.s32.totalorder %s24, 3
        %s284 = scalar_select %p283, %s24, 3
        %s285 = smul.addr %s284, 4
        %s286 = smul.addr %s285, 8
        %s287 = scalar_lea.vmem %s1, %s286
        %p288 = pneg %p89
        %p289 = pneg %p86
        %p290 = scmp.lt.s32.totalorder %s24, 3
        %s291 = scalar_select %p290, %s24, 3
        %s292 = scalar_lea.vmem %s2, %s291
        %p293 = pneg %p115
        %p294 = pneg %p112
        %p295 = scmp.lt.s32.totalorder %s24, 3
        %s296 = scalar_select %p295, %s24, 3
        %s297 = smul.addr %s296, 8
        %s298 = smul.addr %s297, 8
        %s299 = scalar_lea.vmem %s3, %s298
        %p300 = pneg %p141
        %p301 = pneg %p138
        %p302 = scmp.lt.s32.totalorder %s24, 3
        %s303 = scalar_select %p302, %s24, 3
        %s304 = scalar_lea.vmem %s4, %s303
        %p305 = pneg %p167
        %p306 = pneg %p164
        %p307 = pneg %p197
        %p308 = pneg %p194
        %s309 = sand.u32 %s184, 1
        %s310 = scalar_lea.sflag [#allocation3], %s309
        %s311 = sand.u32 %s184, 1
        %s312 = smul.addr %s311, 16
        %s313 = scalar_lea.vmem [#allocation2], %s312
        %s314 = smul.u32 2, %s26
        %p315 = scmp.lt.s32.totalorder %s25, 1
        %s316 = scalar_select %p315, %s25, 1
        %p317 = scmp.lt.s32.totalorder %s24, 3
        %s318 = scalar_select %p317, %s24, 3
        %p319 = scmp.lt.s32.totalorder %s314, 1
        %s320 = scalar_select %p319, %s314, 1
        %s321 = smul.addr %s318, 2
        %s322 = sadd.s32 %s320, %s321
        %s323 = smul.addr %s316, 8
        %s324 = sadd.s32 %s322, %s323
        %s325 = smul.addr %s324, 8
        %s326 = scalar_lea.vmem %s0, %s325
        %s327 = smul.u32 2, %s26
        %p328 = scmp.lt.s32.totalorder %s24, 3
        %s329 = scalar_select %p328, %s24, 3
        %s330 = smul.addr %s329, 4
        %s331 = smul.addr %s330, 8
        %s332 = scalar_lea.vmem %s1, %s331
        %p333 = scmp.lt.s32.totalorder %s24, 3
        %s334 = scalar_select %p333, %s24, 3
        %s335 = scalar_lea.vmem %s2, %s334
        %p336 = scmp.lt.s32.totalorder %s24, 3
        %s337 = scalar_select %p336, %s24, 3
        %s338 = smul.addr %s337, 8
        %s339 = smul.addr %s338, 8
        %s340 = scalar_lea.vmem %s3, %s339
        %p341 = scmp.lt.s32.totalorder %s24, 3
        %s342 = scalar_select %p341, %s24, 3
        %s343 = scalar_lea.vmem %s4, %s342
        %s344 = smul.u32 2, %s26
        %v345 = vld [vmem:[%s326] sm:$0xff]
        %v346 = vld [vmem:[%s326 + $0x8] sm:$0xff]
        %v347 = vld [vmem:[%s332] sm:$0xff]
        %v348 = vld [vmem:[%s332 + $0x8] sm:$0xff]
        %v349 = vld [vmem:[%s332 + $0x10] sm:$0xff]
        %v350 = vld [vmem:[%s332 + $0x18] sm:$0xff]
        %v351 = vld [vmem:[%s340] sm:$0xff]
        %v352 = vld [vmem:[%s340 + $0x8] sm:$0xff]
        %v353 = vld [vmem:[%s340 + $0x10] sm:$0xff]
        %v354 = vld [vmem:[%s340 + $0x18] sm:$0xff]
        %v355 = vld [vmem:[%s340 + $0x20] sm:$0xff]
        %v356 = vld [vmem:[%s340 + $0x28] sm:$0xff]
        %v357 = vld [vmem:[%s340 + $0x30] sm:$0xff]
        %v358 = vld [vmem:[%s340 + $0x38] sm:$0xff]
        %v359 = vld [vmem:[%s335] sm:$0x1]
        %v361 = vperm.slane %v359, 0
        %vm363 = vcmask 261120
        %v365 = vsel %vm363, %v345, 0
        %v368 = vsel %vm363, %v346, 0
        %370 = vmatpush.msra.mxu0 0.0
        %371 = vmatpush.msra.mxu0 0.0
        %372 = vmatpush.msra.mxu0 0.0
        %373 = vmatpush.msra.mxu0 0.0
        %374 = vmatpush.msra.mxu0 0.0
        %375 = vmatpush.msra.mxu0 0.0
        %376 = vmatpush.msra.mxu0 0.0
        %377 = vmatpush.msra.mxu0 0.0
        %378 = vmatpush.msra.mxu0 0.0
        %379 = vmatpush.msra.mxu0 0.0
        %380 = vmatpush.msra.mxu0 0.0
        %381 = vmatpush.msra.mxu0 0.0
        %382 = vmatpush.msra.mxu0 %v350
        %383 = vmatpush.msra.mxu0 %v349
        %384 = vmatpush.msra.mxu0 %v348
        %385 = vmatpush.msra.mxu0 %v347
        %386 = vmatmul.f32.gmra.mxu0 %v365
        %v387 = vpop.f32.mrf.mxu0
        %v388 = vadd.f32 %v361, %v387
        %389 = vmatmul.f32.gmra.mxu0 %v368
        %v390 = vpop.f32.mrf.mxu0
        %v391 = vadd.f32 %v361, %v390
        %392 = vdwg.mxu0
        %v393 = vmul.f32 %v388, %v388
        %v394 = vmul.f32 %v391, %v391
        %v395 = vmul.f32 %v388, %v393
        %v396 = vmul.f32 %v391, %v394
        %v397 = vmul.f32 %v395, 0.044715
        %v398 = vmul.f32 %v396, 0.044715
        %v399 = vadd.f32 %v388, %v397
        %v400 = vadd.f32 %v391, %v398
        %v401 = vmul.f32 %v399, 0.7978846
        %v402 = vmul.f32 %v400, 0.7978846
        %v403 = vtanh.pop %v401
        %v404 = vtanh.pop %v402
        %v405 = vadd.f32 %v403, 1.0
        %v406 = vadd.f32 %v404, 1.0
        %v407 = vmul.f32 %v405, 0.5
        %v408 = vmul.f32 %v406, 0.5
        %v409 = vmul.f32 %v388, %v407
        %v410 = vmul.f32 %v391, %v408
        %v411 = vld [vmem:[%s343] sm:$0x1]
        %v413 = vperm.slane %v411, 0
        %vm415 = vcmask 523264
        %v417 = vsel %vm415, %v409, 0
        %v420 = vsel %vm415, %v410, 0
        %422 = vmatpush.msra.mxu0 0.0
        %423 = vmatpush.msra.mxu0 0.0
        %424 = vmatpush.msra.mxu0 0.0
        %425 = vmatpush.msra.mxu0 0.0
        %426 = vmatpush.msra.mxu0 0.0
        %427 = vmatpush.msra.mxu0 0.0
        %428 = vmatpush.msra.mxu0 0.0
        %429 = vmatpush.msra.mxu0 0.0
        %430 = vmatpush.msra.mxu0 %v358
        %431 = vmatpush.msra.mxu0 %v357
        %432 = vmatpush.msra.mxu0 %v356
        %433 = vmatpush.msra.mxu0 %v355
        %434 = vmatpush.msra.mxu0 %v354
        %435 = vmatpush.msra.mxu0 %v353
        %436 = vmatpush.msra.mxu0 %v352
        %437 = vmatpush.msra.mxu0 %v351
        %438 = vmatmul.f32.gmra.mxu0 %v417
        %v439 = vpop.f32.mrf.mxu0
        %v440 = vadd.f32 %v413, %v439
        %441 = vmatmul.f32.gmra.mxu0 %v420
        %v442 = vpop.f32.mrf.mxu0
        %v443 = vadd.f32 %v413, %v442
        %444 = vdwg.mxu0
        %445 = vst.msk [vmem:[%s313] sm:$0xff] %vm363, %v440
        %446 = vst.msk [vmem:[%s313 + $0x8] sm:$0xff] %vm363, %v443
        %s447 = sand.u32 %s184, 1
        %s448 = scalar_lea.sflag [#allocation3], %s447
        %s449 = sand.u32 %s184, 1
        %s450 = smul.addr %s449, 16
        %s451 = scalar_lea.vmem [#allocation2], %s450
        // Predicated region
        $region41: #{tpu_custom_call.1} parent=39 // pred_check
          %p452 = pneg %p194
        $region42: #{tpu_custom_call.1} parent=39 // pred_check_branch
          %454 = sbr.rel (%p452) target = $region44
        $region43: #{tpu_custom_call.1} parent=39 // pred_region
          %s455 = smul.u32 2, %s26
          %457 = vsyncadd %s448, 0
          %s458 = smul.addr %s24, 2
          %s459 = sadd.s32 %s455, %s458
          %s460 = smul.addr %s25, 8
          %s461 = sadd.s32 %s459, %s460
          %s462 = smul.addr %s461, 8
          %s463 = scalar_lea.hbm %s5, %s462
          %s464 = sshll.u32 %s451, 4
          %s465 = int_to_ptr.vmem [resolvable:$true] %s464
          %s466 = sshll.u32 %s463, 4
          %s467 = int_to_ptr.hbm [resolvable:$true] %s466
          %472 = dma.vmem_to_hbm [thread:$0]  %s465, 256, %s467, %s448, 128, 128, 8
        $region44: #{tpu_custom_call.1} parent=39 // pred_fallthru
          _
      $region40: #{tpu_custom_call.1} parent=5 // pred_fallthru
        _
      %p473 = scmp.le.s32.totalorder 2, %s14
      // Predicated region
      $region45: #{tpu_custom_call.1} parent=5 // pred_check
        %p474 = pneg %p473
      $region46: #{tpu_custom_call.1} parent=5 // pred_check_branch
        %476 = sbr.rel (%p474) target = $region48
      $region47: #{tpu_custom_call.1} parent=5 // pred_region
        %s477 = ssub.s32 %s14, 2
        // Predicated region
        $region49: #{tpu_custom_call.1} parent=47 // pred_check
          %p478 = pneg %p200
        $region50: #{tpu_custom_call.1} parent=47 // pred_check_branch
          %480 = sbr.rel (%p478) target = $region52
        $region51: #{tpu_custom_call.1} parent=47 // pred_region
          %s481 = sand.u32 %s185, 1
          %s482 = scalar_lea.sflag [#allocation3], %s481
          %s483 = sand.u32 %s185, 1
          %s484 = smul.addr %s483, 16
          %s485 = scalar_lea.vmem [#allocation2], %s484
          %487 = dma.done %s482, 256
        $region52: #{tpu_custom_call.1} parent=47 // pred_fallthru
          _
      $region48: #{tpu_custom_call.1} parent=5 // pred_fallthru
        _
    $region6: #{tpu_custom_call.1} parent=1 // loop_footer
      %s18 = sadd.s32 1, %s14
    $region7: #{tpu_custom_call.1} parent=1 // loop_footer_branch
      %13 = sbr.rel target = $region3
    $region8: #{tpu_custom_call.1} parent=1 // loop_exit
      _
    %488 = vsyncpa [#allocation3], 1
    %s489 = scalar_lea.sflag [#allocation3], 1
    %490 = vsyncpa %s489, 1

</llo_original>
